<compile_context>
chip_gen: v6e
topology: v6e:2x2x1
jax: 0.10.0
libtpu: 0.0.40
codegen_flags: <defaults>
</compile_context>

<pallas_src>
import functools

import jax
import jax.numpy as jnp
import numpy as np
from jax.experimental import pallas as pl
from jax.experimental.pallas import tpu as pltpu


# --------------------------------------------------------------------------
# Pallas kernel: one row-tile of GateLayer (single fused matmul + gating).
# --------------------------------------------------------------------------
def gate_layer_kernel(x_ref, w_ref, b_ref, o_ref, *, d_out, matmul_dtype=None):
    """Fused GateLayer tile.

    Refs (per grid step i over row tiles):
      x_ref : (tm, d_in)        input rows
      w_ref : (d_in, 2*d_out)   [linear | gate] weights, pre-transposed/concat
      b_ref : (1, 2*d_out)      [linear | gate] biases
      o_ref : (tm, d_out)       output rows
    """
    x = x_ref[...]
    w = w_ref[...]
    if matmul_dtype is not None:
        # bf16 MXU path for v6e / v7x (f32 accumulation below).
        x = x.astype(matmul_dtype)
        w = w.astype(matmul_dtype)

    # One wide matmul for both projections; f32 accumulation; one bias add.
    y = jnp.dot(x, w, preferred_element_type=jnp.float32) + b_ref[...]

    lin = y[:, :d_out]
    gate = y[:, d_out:]

    # sigmoid(g) = 1 / (1 + exp(-g)): exp + reciprocal live on the EUP slot.
    sig = pl.reciprocal(1.0 + jnp.exp(-gate), approx=False)

    o_ref[...] = (lin * sig).astype(o_ref.dtype)


# --------------------------------------------------------------------------
# One-time parameter preparation (hoisted out of the forward pass).
# --------------------------------------------------------------------------
def prepare_gate_layer_params(w_linear, b_linear, w_gate, b_gate,
                              *, matmul_dtype=None):
    """Convert PyTorch nn.Linear layout -> fused kernel layout, ONCE.

    w_linear, w_gate : (d_out, d_in)   -> w_cat : (d_in, 2*d_out)
    b_linear, b_gate : (d_out,)        -> b_cat : (1, 2*d_out)
    """
    w_cat = jnp.concatenate([jnp.transpose(w_linear), jnp.transpose(w_gate)],
                            axis=1)
    b_cat = jnp.concatenate([b_linear, b_gate])[None, :].astype(jnp.float32)
    if matmul_dtype is not None:
        w_cat = w_cat.astype(matmul_dtype)
    return w_cat, b_cat


def _round_up(x, m):
    return ((x + m - 1) // m) * m


# --------------------------------------------------------------------------
# Wrapper: flatten leading dims, tile rows, one fused pallas_call.
# --------------------------------------------------------------------------
@functools.partial(jax.jit, static_argnames=("block_rows", "matmul_dtype"))
def gate_layer(x, w_cat, b_cat, *, block_rows=512, matmul_dtype=None):
    """Equivalent of GateLayer.forward(input).

    x     : (..., d_in)
    w_cat : (d_in, 2*d_out)   from prepare_gate_layer_params
    b_cat : (1, 2*d_out)
    returns (..., d_out)
    """
    orig_lead = x.shape[:-1]
    d_in = x.shape[-1]
    two_d_out = w_cat.shape[1]
    d_out = two_d_out // 2

    M = int(np.prod(orig_lead)) if orig_lead else 1
    x2 = x.reshape(M, d_in)

    # Row tile: multiple of 8 (f32 sublane), capped by block_rows.  No explicit
    # padding and no output slice: grid = cdiv(M, tm) and the pipeline masks
    # the ragged final block, so there is no extra HBM pad/slice traffic.
    block_rows = _round_up(block_rows, 8)
    tm = min(block_rows, _round_up(M, 8))
    grid = (pl.cdiv(M, tm),)

    # VMEM budget estimate (bytes): double-buffered x/out tiles, resident
    # weights/bias (pipeline keeps 2 copies), and the (tm, 2*d_out) f32
    # intermediate.  Only raise the scoped limit when actually needed.
    in_itemsize = jnp.dtype(x.dtype).itemsize
    w_itemsize = jnp.dtype(w_cat.dtype).itemsize
    est_vmem = (2 * tm * d_in * in_itemsize          # x tile (double-buffered)
                + 2 * tm * d_out * in_itemsize       # out tile (double-buffered)
                + 2 * (d_in + 1) * two_d_out * w_itemsize  # weights + bias
                + tm * two_d_out * 4)                # f32 matmul result
    compiler_kwargs = dict(dimension_semantics=("parallel",))
    if est_vmem > 8 * 1024 * 1024:
        compiler_kwargs["vmem_limit_bytes"] = min(2 * est_vmem, 96 * 1024 * 1024)

    kernel = functools.partial(gate_layer_kernel, d_out=d_out,
                               matmul_dtype=matmul_dtype)

    out2 = pl.pallas_call(
        kernel,
        out_shape=jax.ShapeDtypeStruct((M, d_out), x.dtype),
        grid=grid,
        in_specs=[
            pl.BlockSpec((tm, d_in), lambda i: (i, 0)),
            # Grid-invariant operands (constant index_map): fetched once and
            # kept VMEM-resident across all row tiles.
            pl.BlockSpec((d_in, two_d_out), lambda i: (0, 0)),
            pl.BlockSpec((1, two_d_out), lambda i: (0, 0)),
        ],
        out_specs=pl.BlockSpec((tm, d_out), lambda i: (i, 0)),
        compiler_params=pltpu.CompilerParams(**compiler_kwargs),
    )(x2, w_cat, b_cat)

    return out2.reshape(orig_lead + (d_out,))


# --------------------------------------------------------------------------
# Pure-JAX reference for correctness checking.
# --------------------------------------------------------------------------
def gate_layer_ref(x, w_linear, b_linear, w_gate, b_gate):
    lin = x @ w_linear.T + b_linear
    gate = x @ w_gate.T + b_gate
    return lin * jax.nn.sigmoid(gate)


# --------------------------------------------------------------------------
# Deterministic parameter init (mirrors nn.Linear default-ish scale).
# --------------------------------------------------------------------------
def init_params(key, d_input, d_output):
    k1, k2, k3, k4 = jax.random.split(key, 4)
    bound = 1.0 / np.sqrt(d_input)
    return {
        "w_linear": jax.random.uniform(k1, (d_output, d_input), jnp.float32,
                                       -bound, bound),
        "b_linear": jax.random.uniform(k2, (d_output,), jnp.float32,
                                       -bound, bound),
        "w_gate": jax.random.uniform(k3, (d_output, d_input), jnp.float32,
                                     -bound, bound),
        "b_gate": jax.random.uniform(k4, (d_output,), jnp.float32,
                                     -bound, bound),
    }


if __name__ == "__main__":
    # Small shapes consistent with how GateLayer is used in the squad model:
    # (batch, seq, d_input) -> (batch, seq, d_output)
    B, T = 2, 8
    d_input, d_output = 32, 32

    key = jax.random.PRNGKey(0)
    pkey, xkey = jax.random.split(key)
    params = init_params(pkey, d_input, d_output)
    x = jax.random.normal(xkey, (B, T, d_input), jnp.float32)

    # One-time layout conversion (transpose + concat) hoisted out of forward.
    w_cat, b_cat = prepare_gate_layer_params(
        params["w_linear"], params["b_linear"],
        params["w_gate"], params["b_gate"])

    out = jax.block_until_ready(gate_layer(x, w_cat, b_cat))
    assert out.shape == (B, T, d_output), out.shape

    ref = gate_layer_ref(x, params["w_linear"], params["b_linear"],
                         params["w_gate"], params["b_gate"])
    # Tolerance covers possible MXU bf16-pass vs. full-f32 matmul differences
    # between the Pallas dot and the XLA reference dot; real layout/gating
    # bugs would show up as O(0.1..1) errors.
    np.testing.assert_allclose(np.asarray(out), np.asarray(ref),
                               rtol=2e-2, atol=2e-2)

    print("KERNEL_OK")
</pallas_src>

<mosaic_0001>
module attributes {stable_mosaic.version = 11 : i64} {
  func.func @gate_layer_kernel(%arg0: i32, %arg1: memref<16x32xf32, #tpu.memory_space<vmem>>, %arg2: memref<32x64xf32, #tpu.memory_space<vmem>>, %arg3: memref<1x64xf32, #tpu.memory_space<vmem>>, %arg4: memref<16x32xf32, #tpu.memory_space<vmem>>) attributes {dimension_semantics = [#tpu.dimension_semantics<parallel>], iteration_bounds = array<i64: 1>, scalar_prefetch = 0 : i64, scratch_operands = 0 : i64, tpu.core_type = #tpu.core_type<tc>, window_params = [{transform_indices = @transform_0, window_bounds = array<i64: 16, 32>}, {pipeline_mode = #tpu.pipeline_mode<synchronous>, transform_indices = @transform_1, window_bounds = array<i64: 32, 64>}, {pipeline_mode = #tpu.pipeline_mode<synchronous>, transform_indices = @transform_2, window_bounds = array<i64: 1, 64>}, {transform_indices = @transform_3, window_bounds = array<i64: 16, 32>}]} {
    %c0 = arith.constant 0 : index
    %c0_0 = arith.constant 0 : index
    %0 = vector.load %arg1[%c0, %c0_0] : memref<16x32xf32, #tpu.memory_space<vmem>>, vector<16x32xf32>
    %c0_1 = arith.constant 0 : index
    %c0_2 = arith.constant 0 : index
    %1 = vector.load %arg2[%c0_1, %c0_2] : memref<32x64xf32, #tpu.memory_space<vmem>>, vector<32x64xf32>
    %cst = arith.constant dense<0.000000e+00> : vector<16x64xf32>
    %2 = tpu.matmul %0, %1, %cst {dimension_numbers = #tpu.dot_dimension_numbers<[1], [0], [0], [1], [0, 0, 1, 1], [], []>} : vector<16x32xf32>, vector<32x64xf32>, vector<16x64xf32> -> vector<16x64xf32>
    %c0_3 = arith.constant 0 : index
    %c0_4 = arith.constant 0 : index
    %3 = vector.load %arg3[%c0_3, %c0_4] : memref<1x64xf32, #tpu.memory_space<vmem>>, vector<1x64xf32>
    %4 = vector.broadcast %3 : vector<1x64xf32> to vector<16x64xf32>
    %5 = arith.addf %2, %4 : vector<16x64xf32>
    %6 = vector.extract_strided_slice %5 {offsets = [0, 0], sizes = [16, 32], strides = [1, 1]} : vector<16x64xf32> to vector<16x32xf32>
    %7 = vector.extract_strided_slice %5 {offsets = [0, 32], sizes = [16, 32], strides = [1, 1]} : vector<16x64xf32> to vector<16x32xf32>
    %cst_5 = arith.constant 0.000000e+00 : f32
    %8 = vector.broadcast %cst_5 : f32 to vector<16x32xf32>
    %9 = arith.subf %8, %7 : vector<16x32xf32>
    %10 = math.exp %9 : vector<16x32xf32>
    %cst_6 = arith.constant 1.000000e+00 : f32
    %11 = vector.broadcast %cst_6 : f32 to vector<16x32xf32>
    %12 = arith.addf %11, %10 : vector<16x32xf32>
    %13 = tpu.reciprocal %12 : vector<16x32xf32> -> vector<16x32xf32>
    %14 = arith.mulf %6, %13 : vector<16x32xf32>
    %c0_7 = arith.constant 0 : index
    %c0_8 = arith.constant 0 : index
    %15 = vector.load %arg4[%c0_7, %c0_8] : memref<16x32xf32, #tpu.memory_space<vmem>>, vector<16x32xf32>
    tpu.vector_store %arg4[%c0_7, %c0_8], %14 {strides = array<i32>} : memref<16x32xf32, #tpu.memory_space<vmem>>, vector<16x32xf32>,
    return
  }
  func.func @transform_0(%arg0: i32) -> (i32, i32) {
    %c0_i32 = arith.constant 0 : i32
    %c0_i32_0 = arith.constant 0 : i32
    return %arg0, %c0_i32 : i32, i32
  }
  func.func @transform_1(%arg0: i32) -> (i32, i32) {
    %c0_i32 = arith.constant 0 : i32
    %c0_i32_0 = arith.constant 0 : i32
    %c0_i32_1 = arith.constant 0 : i32
    return %c0_i32, %c0_i32_0 : i32, i32
  }
  func.func @transform_2(%arg0: i32) -> (i32, i32) {
    %c0_i32 = arith.constant 0 : i32
    %c0_i32_0 = arith.constant 0 : i32
    %c0_i32_1 = arith.constant 0 : i32
    return %c0_i32, %c0_i32_0 : i32, i32
  }
  func.func @transform_3(%arg0: i32) -> (i32, i32) {
    %c0_i32 = arith.constant 0 : i32
    %c0_i32_0 = arith.constant 0 : i32
    return %arg0, %c0_i32 : i32, i32
  }
}

</mosaic_0001>

<llo_original>
// kernel: gate_layer.1
$region0: #{gate_layer.1}
  #allocation0 [shape = 'u32[]', space=smem, size = 0x4, offset = 0x4, fixed_abs, tag = 'smem constant byte address 0x4 - core index']
  #allocation1 [shape = 'u32[144,128]{1,0:T(1,128)}', space=vmem, size = 0x12000, scoped, tag = 'internal scratch']
  %s0 = inlined_call_operand.hbm [shape: f32[16,32], index: 0, kind: input, shape index: {}]
  %s1 = inlined_call_operand.hbm [shape: f32[32,64], index: 1, kind: input, shape index: {}]
  %s2 = inlined_call_operand.vmem [shape: f32[1,64], index: 2, kind: input, shape index: {}]
  %s3 = inlined_call_operand.hbm [shape: f32[16,32], index: 3, kind: output, shape index: {}]
  %s4 = sld [smem:[#allocation0]]
  $region30: #{gate_layer.1} parent=0
    _
  %s6 = ssub.s32 1, %s4
  %s7 = scalar_select 0, %s6, %s4
  $region1: #{gate_layer.1} parent=0
    #allocation2 [shape = 'u8[8192]{0}', space=vmem, size = 0x2000, scoped, tag = 'input window, operand 0, single buffered']
    #allocation3 [shape = 's32[1]{0}', space=sflag, size = 0x4, scoped, tag = 'scoped memory for gate_layer.1']
    #allocation4 [shape = 's32[1]{0}', space=sflag, size = 0x4, scoped, tag = 'scoped memory for gate_layer.1']
    #allocation5 [shape = 'u8[16384]{0}', space=vmem, size = 0x4000, scoped, tag = 'input window, operand 1, single buffered']
    #allocation6 [shape = 's32[1]{0}', space=sflag, size = 0x4, scoped, tag = 'scoped memory for gate_layer.1']
    #allocation7 [shape = 'u8[8192]{0}', space=vmem, size = 0x2000, scoped, tag = 'output window, operand 0, single buffered']
    %8 = vsyncpa [#allocation3], 0
    %9 = vsyncpa [#allocation6], 0
    %10 = vsyncpa [#allocation4], 0
    // Predicated region
    $region2: #{gate_layer.1} parent=1 // pred_check
      _
    $region3: #{gate_layer.1} parent=1 // pred_check_branch
      %12 = sbr.rel (0) target = $region5
    $region4: #{gate_layer.1} parent=1 // pred_region
      %s14 = ssub.s32 256, 256
      %15 = vsyncadd [#allocation3], %s14
      %s16 = sshll.u32 [#allocation2], 4
      %s17 = int_to_ptr.vmem [resolvable:$true] %s16
      %22 = dma.hbm_to_vmem [thread:$0]  %s0, 256, %s17, [#allocation3], 128, 128, 8
    $region5: #{gate_layer.1} parent=1 // pred_fallthru
      _
    // Predicated region
    $region6: #{gate_layer.1} parent=1 // pred_check
      _
    $region7: #{gate_layer.1} parent=1 // pred_check_branch
      %24 = sbr.rel (0) target = $region9
    $region8: #{gate_layer.1} parent=1 // pred_region
      %s26 = ssub.s32 512, 512
      %27 = vsyncadd [#allocation6], %s26
      %s28 = sshll.u32 [#allocation5], 4
      %s29 = int_to_ptr.vmem [resolvable:$true] %s28
      %34 = dma.hbm_to_vmem [thread:$0]  %s1, 512, %s29, [#allocation6], 128, 128, 8
    $region9: #{gate_layer.1} parent=1 // pred_fallthru
      _
    // Predicated region
    $region10: #{gate_layer.1} parent=1 // pred_check
      _
    $region11: #{gate_layer.1} parent=1 // pred_check_branch
      %36 = sbr.rel (0) target = $region13
    $region12: #{gate_layer.1} parent=1 // pred_region
      _
    $region13: #{gate_layer.1} parent=1 // pred_fallthru
      _
    // Predicated region
    $region14: #{gate_layer.1} parent=1 // pred_check
      _
    $region15: #{gate_layer.1} parent=1 // pred_check_branch
      %38 = sbr.rel (0) target = $region17
    $region16: #{gate_layer.1} parent=1 // pred_region
      %39 = dma.done [#allocation3], 256
    $region17: #{gate_layer.1} parent=1 // pred_fallthru
      _
    // Predicated region
    $region18: #{gate_layer.1} parent=1 // pred_check
      _
    $region19: #{gate_layer.1} parent=1 // pred_check_branch
      %41 = sbr.rel (0) target = $region21
    $region20: #{gate_layer.1} parent=1 // pred_region
      %42 = dma.done [#allocation6], 512
    $region21: #{gate_layer.1} parent=1 // pred_fallthru
      _
    %v43 = vld [vmem:[#allocation2] sm:$0xff]
    %v44 = vld [vmem:[#allocation2 + $0x8] sm:$0xff]
    %v45 = vld [vmem:[#allocation5] sm:$0xff]
    %v46 = vld [vmem:[#allocation5 + $0x8] sm:$0xff]
    %v47 = vld [vmem:[#allocation5 + $0x10] sm:$0xff]
    %v48 = vld [vmem:[#allocation5 + $0x18] sm:$0xff]
    %v49 = vld [vmem:[%s2] sm:$0x1]
    %v51 = vlaneseq
    %v52 = vshrl.u32 %v51, 7
    %v53 = vsub.s32 0, %v52
    %v54 = vrot.slane %v49, %v53
    %vm56 = vcmask 261120
    %v58 = vsel %vm56, %v43, 0
    %v61 = vsel %vm56, %v44, 0
    %63 = vmatprep.subr.mxu0 0.0
    %64 = vmatpush1.msra.mxu0 0.0
    %65 = vmatprep.subr.mxu0 0.0
    %66 = vmatpush1.msra.mxu0 0.0
    %67 = vmatprep.subr.mxu0 0.0
    %68 = vmatpush1.msra.mxu0 0.0
    %69 = vmatprep.subr.mxu0 0.0
    %70 = vmatpush1.msra.mxu0 0.0
    %71 = vmatprep.subr.mxu0 0.0
    %72 = vmatpush1.msra.mxu0 0.0
    %73 = vmatprep.subr.mxu0 0.0
    %74 = vmatpush1.msra.mxu0 0.0
    %75 = vmatprep.subr.mxu0 0.0
    %76 = vmatpush1.msra.mxu0 0.0
    %77 = vmatprep.subr.mxu0 0.0
    %78 = vmatpush1.msra.mxu0 0.0
    %79 = vmatprep.subr.mxu0 0.0
    %80 = vmatpush1.msra.mxu0 0.0
    %81 = vmatprep.subr.mxu0 0.0
    %82 = vmatpush1.msra.mxu0 0.0
    %83 = vmatprep.subr.mxu0 0.0
    %84 = vmatpush1.msra.mxu0 0.0
    %85 = vmatprep.subr.mxu0 0.0
    %86 = vmatpush1.msra.mxu0 0.0
    %87 = vmatprep.subr.mxu0 0.0
    %88 = vmatpush1.msra.mxu0 %v48
    %89 = vmatprep.subr.mxu0 0.0
    %90 = vmatpush1.msra.mxu0 %v47
    %91 = vmatprep.subr.mxu0 0.0
    %92 = vmatpush1.msra.mxu0 %v46
    %93 = vmatprep.subr.mxu0 0.0
    %94 = vmatpush1.msra.mxu0 %v45
    %95 = vmatprep.subr.mxu0 0.0
    %96 = vmatpush2.msra.mxu0 0.0
    %97 = vmatprep.subr.mxu0 0.0
    %98 = vmatpush2.msra.mxu0 0.0
    %99 = vmatprep.subr.mxu0 0.0
    %100 = vmatpush2.msra.mxu0 0.0
    %101 = vmatprep.subr.mxu0 0.0
    %102 = vmatpush2.msra.mxu0 0.0
    %103 = vmatprep.subr.mxu0 0.0
    %104 = vmatpush2.msra.mxu0 0.0
    %105 = vmatprep.subr.mxu0 0.0
    %106 = vmatpush2.msra.mxu0 0.0
    %107 = vmatprep.subr.mxu0 0.0
    %108 = vmatpush2.msra.mxu0 0.0
    %109 = vmatprep.subr.mxu0 0.0
    %110 = vmatpush2.msra.mxu0 0.0
    %111 = vmatprep.subr.mxu0 0.0
    %112 = vmatpush2.msra.mxu0 0.0
    %113 = vmatprep.subr.mxu0 0.0
    %114 = vmatpush2.msra.mxu0 0.0
    %115 = vmatprep.subr.mxu0 0.0
    %116 = vmatpush2.msra.mxu0 0.0
    %117 = vmatprep.subr.mxu0 0.0
    %118 = vmatpush2.msra.mxu0 0.0
    %119 = vmatprep.subr.mxu0 0.0
    %120 = vmatpush2.msra.mxu0 0.0
    %121 = vmatprep.subr.mxu0 0.0
    %122 = vmatpush2.msra.mxu0 0.0
    %123 = vmatprep.subr.mxu0 0.0
    %124 = vmatpush2.msra.mxu0 0.0
    %125 = vmatprep.subr.mxu0 0.0
    %126 = vmatpush2.msra.mxu0 0.0
    %127 = vmatprep.mubr.f32.mxu0 0.0
    %128 = vmatmul.mubr.f32.gmra.mxu0 %v58
    %v129 = vpop.f32.mrf.mxu0
    %v130 = vadd.f32 %v54, %v129
    %v131 = vpop.f32.mrf.mxu0
    %132 = vmatprep.mubr.f32.mxu0 0.0
    %133 = vmatmul.mubr.f32.gmra.mxu0 %v61
    %v134 = vpop.f32.mrf.mxu0
    %v135 = vadd.f32 %v54, %v134
    %v136 = vpop.f32.mrf.mxu0
    %137 = vdwg.mxu0
    %v138 = vsub.f32 0.0, %v130
    %v139 = vsub.f32 0.0, %v135
    %v140 = vmul.f32 %v138, 1.442695
    %v141 = vpow.pop %v140
    %v142 = vmul.f32 %v139, 1.442695
    %v143 = vpow.pop %v142
    %v144 = vadd.f32 %v141, 1.0
    %v145 = vadd.f32 %v143, 1.0
    %v146 = vrcp.pop %v144
    %v147 = vrcp.pop %v145
    %150 = vrot.lane.b32.xlu0 %v146, 96
    %v151 = vpop.permute.xlu0 %150
    %152 = vrot.lane.b32.xlu0 %v147, 96
    %v153 = vpop.permute.xlu0 %152
    %v156 = vmul.f32 %v130, %v151
    %v157 = vmul.f32 %v135, %v153
    %158 = vst.msk [vmem:[#allocation7] sm:$0xff] %vm56, %v156
    %159 = vst.msk [vmem:[#allocation7 + $0x8] sm:$0xff] %vm56, %v157
    // Predicated region
    $region22: #{gate_layer.1} parent=1 // pred_check
      _
    $region23: #{gate_layer.1} parent=1 // pred_check_branch
      %161 = sbr.rel (0) target = $region25
    $region24: #{gate_layer.1} parent=1 // pred_region
      %s163 = ssub.s32 256, 256
      %164 = vsyncadd [#allocation4], %s163
      %s165 = sshll.u32 [#allocation7], 4
      %s166 = int_to_ptr.vmem [resolvable:$true] %s165
      %171 = dma.vmem_to_hbm [thread:$0]  %s166, 256, %s3, [#allocation4], 128, 128, 8
    $region25: #{gate_layer.1} parent=1 // pred_fallthru
      _
    // Predicated region
    $region26: #{gate_layer.1} parent=1 // pred_check
      _
    $region27: #{gate_layer.1} parent=1 // pred_check_branch
      %173 = sbr.rel (0) target = $region29
    $region28: #{gate_layer.1} parent=1 // pred_region
      %174 = dma.done [#allocation4], 256
    $region29: #{gate_layer.1} parent=1 // pred_fallthru
      _
    %175 = vsyncpa [#allocation3], 1
    %176 = vsyncpa [#allocation6], 1
    %177 = vsyncpa [#allocation4], 1

</llo_original>
